<compile_context>
chip_gen: v7x
topology: tpu7x:2x2x1
jax: 0.10.0
libtpu: 0.0.40
codegen_flags: <defaults>
</compile_context>

<pallas_src>
import functools

import jax
import jax.numpy as jnp
from jax.experimental import pallas as pl
from jax.experimental.pallas import tpu as pltpu


def _context_gating_kernel(w_ref, b_ref, x_ref, o_ref):
    # w_ref: SMEM (C, C)   -- PyTorch nn.Linear weight (y = x @ W^T + b)
    # b_ref: SMEM (C,)
    # x_ref, o_ref: VMEM (C, TP) -- one batch element, TP pixels on the lane axis
    c_dim, _ = x_ref.shape
    x = x_ref[...].astype(jnp.float32)            # (C, TP)

    rows = []
    for c in range(c_dim):                        # fully unrolled: C is small/static
        acc = w_ref[c, 0] * x[0:1, :]
        for k in range(1, c_dim):
            acc = acc + w_ref[c, k] * x[k:k + 1, :]
        gate = jax.nn.sigmoid(acc + b_ref[c])     # sigmoid(Wx + b)
        rows.append(x[c:c + 1, :] * gate)         # x * sigmoid(lin)

    o_ref[...] = jnp.concatenate(rows, axis=0).astype(o_ref.dtype)


@functools.partial(jax.jit, static_argnames=("lane_tile",))
def context_gating_forward(x, weight, bias, *, lane_tile=2048):
    """x: (N, C, H, W). weight: (C, C) in PyTorch convention. bias: (C,)."""
    n, c, h, w = x.shape
    p = h * w
    x3 = x.reshape(n, c, p)                       # contiguous view, no data movement

    # Lane-dim tile: a multiple of 128 (or the full extent when P isn't).
    if p % 128 == 0:
        tp = max(128, (min(p, lane_tile) // 128) * 128)
    else:
        tp = p                                    # full-extent last dim is always legal

    grid = (n, pl.cdiv(p, tp))

    block = pl.BlockSpec((None, c, tp), lambda ni, pi: (ni, 0, pi))

    out3 = pl.pallas_call(
        _context_gating_kernel,
        out_shape=jax.ShapeDtypeStruct((n, c, p), x.dtype),
        grid=grid,
        in_specs=[
            pl.BlockSpec(memory_space=pltpu.MemorySpace.SMEM),   # weight (C, C)
            pl.BlockSpec(memory_space=pltpu.MemorySpace.SMEM),   # bias (C,)
            block,                                               # x tile
        ],
        out_specs=block,
        compiler_params=pltpu.CompilerParams(
            dimension_semantics=("parallel", "parallel")),
    )(weight, bias, x3)

    return out3.reshape(n, c, h, w)


def _reference_context_gating(x, weight, bias):
    # Pure-JAX reference mirroring the PyTorch module exactly.
    lin = jnp.einsum("nkhw,ck->nchw", x, weight) + bias[None, :, None, None]
    return x * jax.nn.sigmoid(lin)


if __name__ == "__main__":
    key = jax.random.PRNGKey(0)
    k_x, k_w, k_b = jax.random.split(key, 3)

    N, C, H, W = 2, 4, 16, 16                     # input_num = C = 4
    x = jax.random.normal(k_x, (N, C, H, W), dtype=jnp.float32)

    # Deterministic init matching nn.Linear default: U(-1/sqrt(C), 1/sqrt(C)).
    bound = 1.0 / jnp.sqrt(jnp.float32(C))
    weight = jax.random.uniform(k_w, (C, C), minval=-bound, maxval=bound,
                                dtype=jnp.float32)
    bias = jax.random.uniform(k_b, (C,), minval=-bound, maxval=bound,
                              dtype=jnp.float32)

    out = context_gating_forward(x, weight, bias)
    out = jax.block_until_ready(out)

    ref = _reference_context_gating(x, weight, bias)
    assert out.shape == (N, C, H, W)
    assert jnp.allclose(out, ref, atol=1e-5, rtol=1e-5), "mismatch vs reference"

    print("KERNEL_OK")
</pallas_src>

<mosaic_0001>
module attributes {stable_mosaic.version = 11 : i64} {
  func.func @_context_gating_kernel(%arg0: i32, %arg1: i32, %arg2: memref<4x4xf32, #tpu.memory_space<smem>>, %arg3: memref<4xf32, #tpu.memory_space<smem>>, %arg4: memref<1x4x256xf32, #tpu.memory_space<vmem>>, %arg5: memref<1x4x256xf32, #tpu.memory_space<vmem>>) attributes {dimension_semantics = [#tpu.dimension_semantics<parallel>, #tpu.dimension_semantics<parallel>], iteration_bounds = array<i64: 2, 1>, scalar_prefetch = 0 : i64, scratch_operands = 0 : i64, tpu.core_type = #tpu.core_type<tc>, window_params = [{transform_indices = @transform_0, window_bounds = array<i64: 4, 4>}, {transform_indices = @transform_1, window_bounds = array<i64: 4>}, {transform_indices = @transform_2, window_bounds = array<i64: 1, 4, 256>}, {transform_indices = @transform_3, window_bounds = array<i64: 1, 4, 256>}]} {
    %c0 = arith.constant 0 : index
    %c0_0 = arith.constant 0 : index
    %c0_1 = arith.constant 0 : index
    %0 = vector.load %arg4[%c0, %c0_0, %c0_1] : memref<1x4x256xf32, #tpu.memory_space<vmem>>, vector<1x4x256xf32>
    %1 = vector.shape_cast %0 : vector<1x4x256xf32> to vector<4x256xf32>
    %c0_2 = arith.constant 0 : index
    %c0_3 = arith.constant 0 : index
    %2 = memref.load %arg2[%c0_2, %c0_3] : memref<4x4xf32, #tpu.memory_space<smem>>
    %3 = vector.extract_strided_slice %1 {offsets = [0, 0], sizes = [1, 256], strides = [1, 1]} : vector<4x256xf32> to vector<1x256xf32>
    %4 = vector.broadcast %2 : f32 to vector<1x256xf32>
    %5 = arith.mulf %4, %3 : vector<1x256xf32>
    %c0_4 = arith.constant 0 : index
    %c1 = arith.constant 1 : index
    %6 = memref.load %arg2[%c0_4, %c1] : memref<4x4xf32, #tpu.memory_space<smem>>
    %7 = vector.extract_strided_slice %1 {offsets = [1, 0], sizes = [1, 256], strides = [1, 1]} : vector<4x256xf32> to vector<1x256xf32>
    %8 = vector.broadcast %6 : f32 to vector<1x256xf32>
    %9 = arith.mulf %8, %7 : vector<1x256xf32>
    %10 = arith.addf %5, %9 : vector<1x256xf32>
    %c0_5 = arith.constant 0 : index
    %c2 = arith.constant 2 : index
    %11 = memref.load %arg2[%c0_5, %c2] : memref<4x4xf32, #tpu.memory_space<smem>>
    %12 = vector.extract_strided_slice %1 {offsets = [2, 0], sizes = [1, 256], strides = [1, 1]} : vector<4x256xf32> to vector<1x256xf32>
    %13 = vector.broadcast %11 : f32 to vector<1x256xf32>
    %14 = arith.mulf %13, %12 : vector<1x256xf32>
    %15 = arith.addf %10, %14 : vector<1x256xf32>
    %c0_6 = arith.constant 0 : index
    %c3 = arith.constant 3 : index
    %16 = memref.load %arg2[%c0_6, %c3] : memref<4x4xf32, #tpu.memory_space<smem>>
    %17 = vector.extract_strided_slice %1 {offsets = [3, 0], sizes = [1, 256], strides = [1, 1]} : vector<4x256xf32> to vector<1x256xf32>
    %18 = vector.broadcast %16 : f32 to vector<1x256xf32>
    %19 = arith.mulf %18, %17 : vector<1x256xf32>
    %20 = arith.addf %15, %19 : vector<1x256xf32>
    %c0_7 = arith.constant 0 : index
    %21 = memref.load %arg3[%c0_7] : memref<4xf32, #tpu.memory_space<smem>>
    %22 = vector.broadcast %21 : f32 to vector<1x256xf32>
    %23 = arith.addf %20, %22 : vector<1x256xf32>
    %24 = arith.negf %23 : vector<1x256xf32>
    %25 = math.exp %24 : vector<1x256xf32>
    %cst = arith.constant 1.000000e+00 : f32
    %26 = vector.broadcast %cst : f32 to vector<1x256xf32>
    %27 = arith.addf %26, %25 : vector<1x256xf32>
    %28 = arith.divf %26, %27 : vector<1x256xf32>
    %29 = vector.extract_strided_slice %1 {offsets = [0, 0], sizes = [1, 256], strides = [1, 1]} : vector<4x256xf32> to vector<1x256xf32>
    %30 = arith.mulf %29, %28 : vector<1x256xf32>
    %c1_8 = arith.constant 1 : index
    %c0_9 = arith.constant 0 : index
    %31 = memref.load %arg2[%c1_8, %c0_9] : memref<4x4xf32, #tpu.memory_space<smem>>
    %32 = vector.extract_strided_slice %1 {offsets = [0, 0], sizes = [1, 256], strides = [1, 1]} : vector<4x256xf32> to vector<1x256xf32>
    %33 = vector.broadcast %31 : f32 to vector<1x256xf32>
    %34 = arith.mulf %33, %32 : vector<1x256xf32>
    %c1_10 = arith.constant 1 : index
    %c1_11 = arith.constant 1 : index
    %35 = memref.load %arg2[%c1_10, %c1_11] : memref<4x4xf32, #tpu.memory_space<smem>>
    %36 = vector.extract_strided_slice %1 {offsets = [1, 0], sizes = [1, 256], strides = [1, 1]} : vector<4x256xf32> to vector<1x256xf32>
    %37 = vector.broadcast %35 : f32 to vector<1x256xf32>
    %38 = arith.mulf %37, %36 : vector<1x256xf32>
    %39 = arith.addf %34, %38 : vector<1x256xf32>
    %c1_12 = arith.constant 1 : index
    %c2_13 = arith.constant 2 : index
    %40 = memref.load %arg2[%c1_12, %c2_13] : memref<4x4xf32, #tpu.memory_space<smem>>
    %41 = vector.extract_strided_slice %1 {offsets = [2, 0], sizes = [1, 256], strides = [1, 1]} : vector<4x256xf32> to vector<1x256xf32>
    %42 = vector.broadcast %40 : f32 to vector<1x256xf32>
    %43 = arith.mulf %42, %41 : vector<1x256xf32>
    %44 = arith.addf %39, %43 : vector<1x256xf32>
    %c1_14 = arith.constant 1 : index
    %c3_15 = arith.constant 3 : index
    %45 = memref.load %arg2[%c1_14, %c3_15] : memref<4x4xf32, #tpu.memory_space<smem>>
    %46 = vector.extract_strided_slice %1 {offsets = [3, 0], sizes = [1, 256], strides = [1, 1]} : vector<4x256xf32> to vector<1x256xf32>
    %47 = vector.broadcast %45 : f32 to vector<1x256xf32>
    %48 = arith.mulf %47, %46 : vector<1x256xf32>
    %49 = arith.addf %44, %48 : vector<1x256xf32>
    %c1_16 = arith.constant 1 : index
    %50 = memref.load %arg3[%c1_16] : memref<4xf32, #tpu.memory_space<smem>>
    %51 = vector.broadcast %50 : f32 to vector<1x256xf32>
    %52 = arith.addf %49, %51 : vector<1x256xf32>
    %53 = arith.negf %52 : vector<1x256xf32>
    %54 = math.exp %53 : vector<1x256xf32>
    %cst_17 = arith.constant 1.000000e+00 : f32
    %55 = vector.broadcast %cst_17 : f32 to vector<1x256xf32>
    %56 = arith.addf %55, %54 : vector<1x256xf32>
    %57 = arith.divf %55, %56 : vector<1x256xf32>
    %58 = vector.extract_strided_slice %1 {offsets = [1, 0], sizes = [1, 256], strides = [1, 1]} : vector<4x256xf32> to vector<1x256xf32>
    %59 = arith.mulf %58, %57 : vector<1x256xf32>
    %c2_18 = arith.constant 2 : index
    %c0_19 = arith.constant 0 : index
    %60 = memref.load %arg2[%c2_18, %c0_19] : memref<4x4xf32, #tpu.memory_space<smem>>
    %61 = vector.extract_strided_slice %1 {offsets = [0, 0], sizes = [1, 256], strides = [1, 1]} : vector<4x256xf32> to vector<1x256xf32>
    %62 = vector.broadcast %60 : f32 to vector<1x256xf32>
    %63 = arith.mulf %62, %61 : vector<1x256xf32>
    %c2_20 = arith.constant 2 : index
    %c1_21 = arith.constant 1 : index
    %64 = memref.load %arg2[%c2_20, %c1_21] : memref<4x4xf32, #tpu.memory_space<smem>>
    %65 = vector.extract_strided_slice %1 {offsets = [1, 0], sizes = [1, 256], strides = [1, 1]} : vector<4x256xf32> to vector<1x256xf32>
    %66 = vector.broadcast %64 : f32 to vector<1x256xf32>
    %67 = arith.mulf %66, %65 : vector<1x256xf32>
    %68 = arith.addf %63, %67 : vector<1x256xf32>
    %c2_22 = arith.constant 2 : index
    %c2_23 = arith.constant 2 : index
    %69 = memref.load %arg2[%c2_22, %c2_23] : memref<4x4xf32, #tpu.memory_space<smem>>
    %70 = vector.extract_strided_slice %1 {offsets = [2, 0], sizes = [1, 256], strides = [1, 1]} : vector<4x256xf32> to vector<1x256xf32>
    %71 = vector.broadcast %69 : f32 to vector<1x256xf32>
    %72 = arith.mulf %71, %70 : vector<1x256xf32>
    %73 = arith.addf %68, %72 : vector<1x256xf32>
    %c2_24 = arith.constant 2 : index
    %c3_25 = arith.constant 3 : index
    %74 = memref.load %arg2[%c2_24, %c3_25] : memref<4x4xf32, #tpu.memory_space<smem>>
    %75 = vector.extract_strided_slice %1 {offsets = [3, 0], sizes = [1, 256], strides = [1, 1]} : vector<4x256xf32> to vector<1x256xf32>
    %76 = vector.broadcast %74 : f32 to vector<1x256xf32>
    %77 = arith.mulf %76, %75 : vector<1x256xf32>
    %78 = arith.addf %73, %77 : vector<1x256xf32>
    %c2_26 = arith.constant 2 : index
    %79 = memref.load %arg3[%c2_26] : memref<4xf32, #tpu.memory_space<smem>>
    %80 = vector.broadcast %79 : f32 to vector<1x256xf32>
    %81 = arith.addf %78, %80 : vector<1x256xf32>
    %82 = arith.negf %81 : vector<1x256xf32>
    %83 = math.exp %82 : vector<1x256xf32>
    %cst_27 = arith.constant 1.000000e+00 : f32
    %84 = vector.broadcast %cst_27 : f32 to vector<1x256xf32>
    %85 = arith.addf %84, %83 : vector<1x256xf32>
    %86 = arith.divf %84, %85 : vector<1x256xf32>
    %87 = vector.extract_strided_slice %1 {offsets = [2, 0], sizes = [1, 256], strides = [1, 1]} : vector<4x256xf32> to vector<1x256xf32>
    %88 = arith.mulf %87, %86 : vector<1x256xf32>
    %c3_28 = arith.constant 3 : index
    %c0_29 = arith.constant 0 : index
    %89 = memref.load %arg2[%c3_28, %c0_29] : memref<4x4xf32, #tpu.memory_space<smem>>
    %90 = vector.extract_strided_slice %1 {offsets = [0, 0], sizes = [1, 256], strides = [1, 1]} : vector<4x256xf32> to vector<1x256xf32>
    %91 = vector.broadcast %89 : f32 to vector<1x256xf32>
    %92 = arith.mulf %91, %90 : vector<1x256xf32>
    %c3_30 = arith.constant 3 : index
    %c1_31 = arith.constant 1 : index
    %93 = memref.load %arg2[%c3_30, %c1_31] : memref<4x4xf32, #tpu.memory_space<smem>>
    %94 = vector.extract_strided_slice %1 {offsets = [1, 0], sizes = [1, 256], strides = [1, 1]} : vector<4x256xf32> to vector<1x256xf32>
    %95 = vector.broadcast %93 : f32 to vector<1x256xf32>
    %96 = arith.mulf %95, %94 : vector<1x256xf32>
    %97 = arith.addf %92, %96 : vector<1x256xf32>
    %c3_32 = arith.constant 3 : index
    %c2_33 = arith.constant 2 : index
    %98 = memref.load %arg2[%c3_32, %c2_33] : memref<4x4xf32, #tpu.memory_space<smem>>
    %99 = vector.extract_strided_slice %1 {offsets = [2, 0], sizes = [1, 256], strides = [1, 1]} : vector<4x256xf32> to vector<1x256xf32>
    %100 = vector.broadcast %98 : f32 to vector<1x256xf32>
    %101 = arith.mulf %100, %99 : vector<1x256xf32>
    %102 = arith.addf %97, %101 : vector<1x256xf32>
    %c3_34 = arith.constant 3 : index
    %c3_35 = arith.constant 3 : index
    %103 = memref.load %arg2[%c3_34, %c3_35] : memref<4x4xf32, #tpu.memory_space<smem>>
    %104 = vector.extract_strided_slice %1 {offsets = [3, 0], sizes = [1, 256], strides = [1, 1]} : vector<4x256xf32> to vector<1x256xf32>
    %105 = vector.broadcast %103 : f32 to vector<1x256xf32>
    %106 = arith.mulf %105, %104 : vector<1x256xf32>
    %107 = arith.addf %102, %106 : vector<1x256xf32>
    %c3_36 = arith.constant 3 : index
    %108 = memref.load %arg3[%c3_36] : memref<4xf32, #tpu.memory_space<smem>>
    %109 = vector.broadcast %108 : f32 to vector<1x256xf32>
    %110 = arith.addf %107, %109 : vector<1x256xf32>
    %111 = arith.negf %110 : vector<1x256xf32>
    %112 = math.exp %111 : vector<1x256xf32>
    %cst_37 = arith.constant 1.000000e+00 : f32
    %113 = vector.broadcast %cst_37 : f32 to vector<1x256xf32>
    %114 = arith.addf %113, %112 : vector<1x256xf32>
    %115 = arith.divf %113, %114 : vector<1x256xf32>
    %116 = vector.extract_strided_slice %1 {offsets = [3, 0], sizes = [1, 256], strides = [1, 1]} : vector<4x256xf32> to vector<1x256xf32>
    %117 = arith.mulf %116, %115 : vector<1x256xf32>
    %118 = tpu.concatenate %30, %59, %88, %117 in 0 : vector<1x256xf32>, vector<1x256xf32>, vector<1x256xf32>, vector<1x256xf32> -> vector<4x256xf32>
    %c0_38 = arith.constant 0 : index
    %c0_39 = arith.constant 0 : index
    %c0_40 = arith.constant 0 : index
    %119 = vector.load %arg5[%c0_38, %c0_39, %c0_40] : memref<1x4x256xf32, #tpu.memory_space<vmem>>, vector<1x4x256xf32>
    %120 = vector.shape_cast %119 : vector<1x4x256xf32> to vector<4x256xf32>
    %121 = vector.shape_cast %118 : vector<4x256xf32> to vector<1x4x256xf32>
    tpu.vector_store %arg5[%c0_38, %c0_39, %c0_40], %121 {strides = array<i32>} : memref<1x4x256xf32, #tpu.memory_space<vmem>>, vector<1x4x256xf32>,
    return
  }
  func.func @transform_0(%arg0: i32, %arg1: i32) -> (i32, i32) {
    %c0_i32 = arith.constant 0 : i32
    %c0_i32_0 = arith.constant 0 : i32
    %c0_i32_1 = arith.constant 0 : i32
    return %c0_i32, %c0_i32_0 : i32, i32
  }
  func.func @transform_1(%arg0: i32, %arg1: i32) -> i32 {
    %c0_i32 = arith.constant 0 : i32
    %c0_i32_0 = arith.constant 0 : i32
    return %c0_i32 : i32
  }
  func.func @transform_2(%arg0: i32, %arg1: i32) -> (i32, i32, i32) {
    %c0_i32 = arith.constant 0 : i32
    %c0_i32_0 = arith.constant 0 : i32
    return %arg0, %c0_i32, %arg1 : i32, i32, i32
  }
  func.func @transform_3(%arg0: i32, %arg1: i32) -> (i32, i32, i32) {
    %c0_i32 = arith.constant 0 : i32
    %c0_i32_0 = arith.constant 0 : i32
    return %arg0, %c0_i32, %arg1 : i32, i32, i32
  }
}

</mosaic_0001>

<llo_original>
// kernel: context_gating_forward.1
$region0: #{context_gating_forward.1}
  #allocation0 [shape = 'u32[]', space=smem, size = 0x4, offset = 0x4, fixed_abs, tag = 'smem constant byte address 0x4 - core index']
  #allocation1 [shape = 'u32[144,128]{1,0:T(1,128)}', space=vmem, size = 0x12000, scoped, tag = 'internal scratch']
  %s0 = inlined_call_operand.vmem [shape: f32[4,4], index: 0, kind: input, shape index: {}]
  %s1 = inlined_call_operand.vmem [shape: f32[4], index: 1, kind: input, shape index: {}]
  %s2 = inlined_call_operand.vmem [shape: f32[2,4,256], index: 2, kind: input, shape index: {}]
  %s3 = inlined_call_operand.vmem [shape: f32[2,4,256], index: 3, kind: output, shape index: {}]
  %s4 = sld [smem:[#allocation0]]
  $region53: #{context_gating_forward.1} parent=0
    _
  %s6 = ssub.s32 1, %s4
  %s7 = scalar_select 0, %s6, %s4
  $region1: #{context_gating_forward.1} parent=0
    #allocation2 [shape = 'u8[2048]{0}', space=smem, size = 0x800, scoped, tag = 'input window, operand 0, single buffered']
    #allocation3 [shape = 's32[2]{0}', space=sflag, size = 0x8, scoped, tag = 'scoped memory for context_gating_forward.1']
    #allocation4 [shape = 'u8[512]{0}', space=smem, size = 0x200, scoped, tag = 'input window, operand 1, single buffered']
    #allocation5 [shape = 's32[1]{0}', space=sflag, size = 0x4, scoped, tag = 'scoped memory for context_gating_forward.1']
    %8 = vsyncpa [#allocation3], 0
    %9 = vsyncpa [#allocation5], 0
    loop: start=0, step=1, limit=4
    $region2: #{context_gating_forward.1} parent=1 // loop_pre_header
      _
    $region3: #{context_gating_forward.1} parent=1 // loop_header
      %s11 = sphi 0, %s15
      %p12 = scmp.ge.s32.totalorder %s11, 4
      %s18 = sphi 0, %s30
      %s19 = sphi 0, %s26
      %s20 = sphi 0, %s18
      %s21 = sphi 0, %s19
      %s22 = sphi 0, %s20
      %s23 = sphi 0, %s21
      %s31 = sphi 0, %s31
      %s33 = sphi 0, %s31
      %s34 = sphi 0, %s33
      %s48 = sphi 0, %s34
      %s52 = sphi 0, %s52
      %s54 = sphi 0, %s52
      %s55 = sphi 0, %s54
      %s69 = sphi 0, %s55
      %s77 = sphi 0, %s79
      %s80 = sphi 0, %s77
      %s81 = sphi 0, %s80
      %s97 = sphi 0, %s81
      %s105 = sphi 0, %s107
      %s108 = sphi 0, %s105
      %s109 = sphi 0, %s108
      %s125 = sphi 0, %s109
    $region4: #{context_gating_forward.1} parent=1 // loop_header_branch
      %14 = sbr.rel (%p12) target = $region8
    $region5: #{context_gating_forward.1} parent=1 // loop_body
      %s16 = ssub.s32 %s11, 1
      %s17 = ssub.s32 %s11, 2
      %s24 = sadd.s32 1, %s19
      %p25 = scmp.ge.s32.totalorder %s24, 1
      %s26 = scalar_select %p25, 0, %s24
      %s27 = sadd.s32 1, %s18
      %s28 = scalar_select %p25, %s27, %s18
      %p29 = scmp.ge.s32.totalorder %s28, 2
      %s30 = scalar_select %p29, 0, %s28
      %s32 = sadd.s32 %s31, 1
      %p35 = scmp.eq.s32.totalorder %s11, 1
      %p36 = scmp.ne.s32.totalorder %s31, %s33
      %p37 = scmp.eq.s32.totalorder %s11, 0
      %p38 = por %p36, %p37
      %p39 = scmp.ne.s32.totalorder %s31, %s33
      %p40 = scmp.eq.s32.totalorder %s16, 1
      %p41 = por %p39, %p40
      %p42 = scmp.ne.s32.totalorder %s33, %s34
      %p43 = scmp.eq.s32.totalorder %s16, 0
      %p44 = por %p42, %p43
      %p45 = scmp.ne.s32.totalorder %s33, %s34
      %p46 = scmp.eq.s32.totalorder %s17, 1
      %p47 = por %p45, %p46
      %p49 = scmp.ne.s32.totalorder %s34, %s48
      %p50 = scmp.eq.s32.totalorder %s17, 0
      %p51 = por %p49, %p50
      %s53 = sadd.s32 %s52, 1
      %p56 = scmp.eq.s32.totalorder %s11, 1
      %p57 = scmp.ne.s32.totalorder %s52, %s54
      %p58 = scmp.eq.s32.totalorder %s11, 0
      %p59 = por %p57, %p58
      %p60 = scmp.ne.s32.totalorder %s52, %s54
      %p61 = scmp.eq.s32.totalorder %s16, 1
      %p62 = por %p60, %p61
      %p63 = scmp.ne.s32.totalorder %s54, %s55
      %p64 = scmp.eq.s32.totalorder %s16, 0
      %p65 = por %p63, %p64
      %p66 = scmp.ne.s32.totalorder %s54, %s55
      %p67 = scmp.eq.s32.totalorder %s17, 1
      %p68 = por %p66, %p67
      %p70 = scmp.ne.s32.totalorder %s55, %s69
      %p71 = scmp.eq.s32.totalorder %s17, 0
      %p72 = por %p70, %p71
      %s73 = ssub.s32 %s18, %s30
      %s74 = ssub.s32 %s19, %s26
      %s75 = sor.u32 %s73, %s74
      %p76 = scmp.eq.s32.totalorder %s75, 0
      %s78 = sadd.s32 %s77, 1
      %s79 = scalar_select %p76, %s77, %s78
      %p82 = pneg %p76
      %p83 = scmp.eq.s32.totalorder %s11, 1
      %p84 = por %p82, %p83
      %p85 = scmp.ne.s32.totalorder %s77, %s80
      %p86 = scmp.eq.s32.totalorder %s11, 0
      %p87 = por %p85, %p86
      %p88 = scmp.ne.s32.totalorder %s77, %s80
      %p89 = scmp.eq.s32.totalorder %s16, 1
      %p90 = por %p88, %p89
      %p91 = scmp.ne.s32.totalorder %s80, %s81
      %p92 = scmp.eq.s32.totalorder %s16, 0
      %p93 = por %p91, %p92
      %p94 = scmp.ne.s32.totalorder %s80, %s81
      %p95 = scmp.eq.s32.totalorder %s17, 1
      %p96 = por %p94, %p95
      %p98 = scmp.ne.s32.totalorder %s81, %s97
      %p99 = scmp.eq.s32.totalorder %s17, 0
      %p100 = por %p98, %p99
      %s101 = ssub.s32 %s18, %s30
      %s102 = ssub.s32 %s19, %s26
      %s103 = sor.u32 %s101, %s102
      %p104 = scmp.eq.s32.totalorder %s103, 0
      %s106 = sadd.s32 %s105, 1
      %s107 = scalar_select %p104, %s105, %s106
      %p110 = pneg %p104
      %p111 = scmp.eq.s32.totalorder %s11, 1
      %p112 = por %p110, %p111
      %p113 = scmp.ne.s32.totalorder %s105, %s108
      %p114 = scmp.eq.s32.totalorder %s11, 0
      %p115 = por %p113, %p114
      %p116 = scmp.ne.s32.totalorder %s105, %s108
      %p117 = scmp.eq.s32.totalorder %s16, 1
      %p118 = por %p116, %p117
      %p119 = scmp.ne.s32.totalorder %s108, %s109
      %p120 = scmp.eq.s32.totalorder %s16, 0
      %p121 = por %p119, %p120
      %p122 = scmp.ne.s32.totalorder %s108, %s109
      %p123 = scmp.eq.s32.totalorder %s17, 1
      %p124 = por %p122, %p123
      %p126 = scmp.ne.s32.totalorder %s109, %s125
      %p127 = scmp.eq.s32.totalorder %s17, 0
      %p128 = por %p126, %p127
      %p129 = scmp.le.s32.totalorder 1, %s11
      %p130 = scmp.lt.s32.totalorder %s11, 3
      %p131 = pnand %p129, %p130
      %p132 = pneg %p131
      // Predicated region
      $region9: #{context_gating_forward.1} parent=5 // pred_check
        _
      $region10: #{context_gating_forward.1} parent=5 // pred_check_branch
        %134 = sbr.rel (%p131) target = $region12
      $region11: #{context_gating_forward.1} parent=5 // pred_region
        %s135 = ssub.s32 %s11, 1
        // Predicated region
        $region13: #{context_gating_forward.1} parent=11 // pred_check
          %p136 = pneg %p44
        $region14: #{context_gating_forward.1} parent=11 // pred_check_branch
          %138 = sbr.rel (%p136) target = $region16
        $region15: #{context_gating_forward.1} parent=11 // pred_region
          %s140 = ssub.s32 64, 64
          %141 = vsyncadd [#allocation3], %s140
          %s143 = sshll.u32 %s0, 4
          %s144 = int_to_ptr.vmem [resolvable:$true] %s143
          %146 = dma.vmem_to_smem %s144, 64, [#allocation2], [#allocation3]
        $region16: #{context_gating_forward.1} parent=11 // pred_fallthru
          _
        // Predicated region
        $region17: #{context_gating_forward.1} parent=11 // pred_check
          %p147 = pneg %p65
        $region18: #{context_gating_forward.1} parent=11 // pred_check_branch
          %149 = sbr.rel (%p147) target = $region20
        $region19: #{context_gating_forward.1} parent=11 // pred_region
          %s151 = ssub.s32 16, 16
          %152 = vsyncadd [#allocation5], %s151
          %s154 = sshll.u32 %s1, 4
          %s155 = int_to_ptr.vmem [resolvable:$true] %s154
          %157 = dma.vmem_to_smem %s155, 16, [#allocation4], [#allocation5]
        $region20: #{context_gating_forward.1} parent=11 // pred_fallthru
          _
      $region12: #{context_gating_forward.1} parent=5 // pred_fallthru
        _
      %p158 = scmp.lt.s32.totalorder %s11, 2
      // Predicated region
      $region21: #{context_gating_forward.1} parent=5 // pred_check
        %p159 = pneg %p158
      $region22: #{context_gating_forward.1} parent=5 // pred_check_branch
        %161 = sbr.rel (%p159) target = $region24
      $region23: #{context_gating_forward.1} parent=5 // pred_region
        // Predicated region
        $region25: #{context_gating_forward.1} parent=23 // pred_check
          %p162 = pneg %p87
        $region26: #{context_gating_forward.1} parent=23 // pred_check_branch
          %164 = sbr.rel (%p162) target = $region28
        $region27: #{context_gating_forward.1} parent=23 // pred_region
          %s165 = smul.u32 2, %s19
          %p166 = scmp.lt.s32.totalorder %s18, 1
          %s167 = scalar_select %p166, %s18, 1
          %p168 = scmp.lt.s32.totalorder %s165, 1
          %s169 = scalar_select %p168, %s165, 1
          %s170 = smul.addr %s167, 2
          %s171 = sadd.s32 %s169, %s170
          %s172 = smul.addr %s171, 4
          %s173 = scalar_lea.vmem %s2, %s172
          %s174 = smul.u32 2, %s19
        $region28: #{context_gating_forward.1} parent=23 // pred_fallthru
          _
      $region24: #{context_gating_forward.1} parent=5 // pred_fallthru
        _
      %p175 = scmp.le.s32.totalorder 1, %s11
      %p176 = scmp.lt.s32.totalorder %s11, 3
      %p177 = pnand %p175, %p176
      %p178 = pneg %p177
      // Predicated region
      $region29: #{context_gating_forward.1} parent=5 // pred_check
        _
      $region30: #{context_gating_forward.1} parent=5 // pred_check_branch
        %180 = sbr.rel (%p177) target = $region32
      $region31: #{context_gating_forward.1} parent=5 // pred_region
        %s181 = ssub.s32 %s11, 1
        // Predicated region
        $region33: #{context_gating_forward.1} parent=31 // pred_check
          %p182 = pneg %p44
        $region34: #{context_gating_forward.1} parent=31 // pred_check_branch
          %184 = sbr.rel (%p182) target = $region36
        $region35: #{context_gating_forward.1} parent=31 // pred_region
          %185 = dma.done [#allocation3], 64
        $region36: #{context_gating_forward.1} parent=31 // pred_fallthru
          _
        // Predicated region
        $region37: #{context_gating_forward.1} parent=31 // pred_check
          %p186 = pneg %p65
        $region38: #{context_gating_forward.1} parent=31 // pred_check_branch
          %188 = sbr.rel (%p186) target = $region40
        $region39: #{context_gating_forward.1} parent=31 // pred_region
          %189 = dma.done [#allocation5], 16
        $region40: #{context_gating_forward.1} parent=31 // pred_fallthru
          _
        %190 = sfence
        %p191 = pneg %p44
        %p192 = pneg %p41
        %p193 = pneg %p65
        %p194 = pneg %p62
        %s195 = smul.u32 2, %s21
        %p196 = scmp.lt.s32.totalorder %s20, 1
        %s197 = scalar_select %p196, %s20, 1
        %p198 = scmp.lt.s32.totalorder %s195, 1
        %s199 = scalar_select %p198, %s195, 1
        %s200 = smul.addr %s197, 2
        %s201 = sadd.s32 %s199, %s200
        %s202 = smul.addr %s201, 4
        %s203 = scalar_lea.vmem %s2, %s202
        %p204 = pneg %p93
        %p205 = pneg %p90
        %p206 = pneg %p121
        %p207 = pneg %p118
        %s208 = smul.u32 2, %s21
        %p209 = scmp.lt.s32.totalorder %s20, 1
        %s210 = scalar_select %p209, %s20, 1
        %p211 = scmp.lt.s32.totalorder %s208, 1
        %s212 = scalar_select %p211, %s208, 1
        %s213 = smul.addr %s210, 2
        %s214 = sadd.s32 %s212, %s213
        %s215 = smul.addr %s214, 4
        %s216 = scalar_lea.vmem %s3, %s215
        %s217 = smul.u32 2, %s21
        %p218 = scmp.lt.s32.totalorder %s20, 1
        %s219 = scalar_select %p218, %s20, 1
        %p220 = scmp.lt.s32.totalorder %s217, 1
        %s221 = scalar_select %p220, %s217, 1
        %s222 = smul.addr %s219, 2
        %s223 = sadd.s32 %s221, %s222
        %s224 = smul.addr %s223, 4
        %s225 = scalar_lea.vmem %s2, %s224
        %s226 = smul.u32 2, %s21
        %s227 = smul.u32 2, %s21
        %p228 = scmp.lt.s32.totalorder %s20, 1
        %s229 = scalar_select %p228, %s20, 1
        %p230 = scmp.lt.s32.totalorder %s227, 1
        %s231 = scalar_select %p230, %s227, 1
        %s232 = smul.addr %s229, 2
        %s233 = sadd.s32 %s231, %s232
        %s234 = smul.addr %s233, 4
        %s235 = scalar_lea.vmem %s3, %s234
        %s236 = smul.u32 2, %s21
        %v237 = vld [vmem:[%s225] sm:$0xff]
        %s238 = sld [smem:[#allocation2]]
        %v239 = vstv %s238
        %v240 = vmul.f32 %v239, %v237
        %s241 = sld [smem:[#allocation2 + $0x1]]
        %v242 = vstv %s241
        %v243 = vmul.f32 %v242, %v237
        %v245 = vrot.slane %v243, 5
        %v246 = vrot.slane %v245, 4
        %v248 = vadd.f32 %v240, %v246
        %s249 = sld [smem:[#allocation2 + $0x2]]
        %v250 = vstv %s249
        %v251 = vmul.f32 %v250, %v237
        %v253 = vrot.slane %v251, 6
        %v254 = vrot.slane %v253, 4
        %v256 = vadd.f32 %v248, %v254
        %s257 = sld [smem:[#allocation2 + $0x3]]
        %v258 = vstv %s257
        %v259 = vmul.f32 %v258, %v237
        %v261 = vrot.slane %v259, 7
        %v262 = vrot.slane %v261, 4
        %v264 = vadd.f32 %v256, %v262
        %s265 = sld [smem:[#allocation4]]
        %v266 = vstv %s265
        %v267 = vadd.f32 %v264, %v266
        %v268 = vxor.u32 %v267, 2147483648
        %v269 = vmul.f32 %v268, 1.442695
        %v270 = vpow.pop %v269
        %v271 = vadd.f32 %v270, 1.0
        %v272 = vrcp.pop %v271
        %v273 = vmul.f32 1.0, %v272
        %v274 = vmul.f32 %v237, %v273
        %s275 = sld [smem:[#allocation2 + $0x80]]
        %v276 = vstv %s275
        %v277 = vmul.f32 %v276, %v237
        %s278 = sld [smem:[#allocation2 + $0x81]]
        %v279 = vstv %s278
        %v280 = vmul.f32 %v279, %v237
        %v282 = vrot.slane %v280, 5
        %v283 = vrot.slane %v282, 4
        %v285 = vadd.f32 %v277, %v283
        %s286 = sld [smem:[#allocation2 + $0x82]]
        %v287 = vstv %s286
        %v288 = vmul.f32 %v287, %v237
        %v290 = vrot.slane %v288, 6
        %v291 = vrot.slane %v290, 4
        %v293 = vadd.f32 %v285, %v291
        %s294 = sld [smem:[#allocation2 + $0x83]]
        %v295 = vstv %s294
        %v296 = vmul.f32 %v295, %v237
        %v298 = vrot.slane %v296, 7
        %v299 = vrot.slane %v298, 4
        %v301 = vadd.f32 %v293, %v299
        %s302 = sld [smem:[#allocation4 + $0x1]]
        %v303 = vstv %s302
        %v304 = vadd.f32 %v301, %v303
        %v305 = vxor.u32 %v304, 2147483648
        %v306 = vmul.f32 %v305, 1.442695
        %v307 = vpow.pop %v306
        %v308 = vadd.f32 %v307, 1.0
        %v309 = vrcp.pop %v308
        %v310 = vmul.f32 1.0, %v309
        %v312 = vrot.slane %v310, 7
        %v314 = vmul.f32 %v237, %v312
        %s315 = sld [smem:[#allocation2 + $0x100]]
        %v316 = vstv %s315
        %v317 = vmul.f32 %v316, %v237
        %s318 = sld [smem:[#allocation2 + $0x101]]
        %v319 = vstv %s318
        %v320 = vmul.f32 %v319, %v237
        %v322 = vrot.slane %v320, 5
        %v323 = vrot.slane %v322, 4
        %v325 = vadd.f32 %v317, %v323
        %s326 = sld [smem:[#allocation2 + $0x102]]
        %v327 = vstv %s326
        %v328 = vmul.f32 %v327, %v237
        %v330 = vrot.slane %v328, 6
        %v331 = vrot.slane %v330, 4
        %v333 = vadd.f32 %v325, %v331
        %s334 = sld [smem:[#allocation2 + $0x103]]
        %v335 = vstv %s334
        %v336 = vmul.f32 %v335, %v237
        %v338 = vrot.slane %v336, 7
        %v339 = vrot.slane %v338, 4
        %v341 = vadd.f32 %v333, %v339
        %s342 = sld [smem:[#allocation4 + $0x2]]
        %v343 = vstv %s342
        %v344 = vadd.f32 %v341, %v343
        %v345 = vxor.u32 %v344, 2147483648
        %v346 = vmul.f32 %v345, 1.442695
        %v347 = vpow.pop %v346
        %v348 = vadd.f32 %v347, 1.0
        %v349 = vrcp.pop %v348
        %v350 = vmul.f32 1.0, %v349
        %v352 = vrot.slane %v350, 6
        %v354 = vmul.f32 %v237, %v352
        %s355 = sld [smem:[#allocation2 + $0x180]]
        %v356 = vstv %s355
        %v357 = vmul.f32 %v356, %v237
        %s358 = sld [smem:[#allocation2 + $0x181]]
        %v359 = vstv %s358
        %v360 = vmul.f32 %v359, %v237
        %v362 = vrot.slane %v360, 5
        %v363 = vrot.slane %v362, 4
        %v365 = vadd.f32 %v357, %v363
        %s366 = sld [smem:[#allocation2 + $0x182]]
        %v367 = vstv %s366
        %v368 = vmul.f32 %v367, %v237
        %v370 = vrot.slane %v368, 6
        %v371 = vrot.slane %v370, 4
        %v373 = vadd.f32 %v365, %v371
        %s374 = sld [smem:[#allocation2 + $0x183]]
        %v375 = vstv %s374
        %v376 = vmul.f32 %v375, %v237
        %v378 = vrot.slane %v376, 7
        %v379 = vrot.slane %v378, 4
        %v381 = vadd.f32 %v373, %v379
        %s382 = sld [smem:[#allocation4 + $0x3]]
        %v383 = vstv %s382
        %v384 = vadd.f32 %v381, %v383
        %v385 = vxor.u32 %v384, 2147483648
        %v386 = vmul.f32 %v385, 1.442695
        %v387 = vpow.pop %v386
        %v388 = vadd.f32 %v387, 1.0
        %v389 = vrcp.pop %v388
        %v390 = vmul.f32 1.0, %v389
        %v392 = vrot.slane %v390, 5
        %v394 = vmul.f32 %v237, %v392
        %v396 = vlaneseq
        %v397 = vshrl.u32 %v396, 7
        %v398 = vsub.s32 0, %v397
        %v399 = vrot.slane %v274, %v398
        %v400 = vlaneseq
        %v401 = vshrl.u32 %v400, 7
        %v402 = vsub.s32 4, %v401
        %v403 = vrot.slane %v274, %v402
        %v407 = vlaneseq
        %v408 = vshrl.u32 %v407, 7
        %v409 = vsub.s32 1, %v408
        %v410 = vrot.slane %v314, %v409
        %v411 = vlaneseq
        %v412 = vshrl.u32 %v411, 7
        %v413 = vsub.s32 5, %v412
        %v414 = vrot.slane %v314, %v413
        %v418 = vlaneseq
        %v419 = vshrl.u32 %v418, 7
        %v420 = vsub.s32 2, %v419
        %v421 = vrot.slane %v354, %v420
        %v422 = vlaneseq
        %v423 = vshrl.u32 %v422, 7
        %v424 = vsub.s32 6, %v423
        %v425 = vrot.slane %v354, %v424
        %v429 = vlaneseq
        %v430 = vshrl.u32 %v429, 7
        %v431 = vsub.s32 3, %v430
        %v432 = vrot.slane %v394, %v431
        %v433 = vlaneseq
        %v434 = vshrl.u32 %v433, 7
        %v435 = vsub.s32 7, %v434
        %v436 = vrot.slane %v394, %v435
        %vm439 = vcmask 1040384
        %v440 = vsel %vm439, %v399, %v410
        %v441 = vsel %vm439, %v403, %v414
        %vm442 = vcmask 1041408
        %v443 = vsel %vm442, %v440, %v421
        %v444 = vsel %vm442, %v441, %v425
        %vm445 = vcmask 1042432
        %v446 = vsel %vm445, %v443, %v432
        %v447 = vsel %vm445, %v444, %v436
        %v450 = vcombine.low %v446, %v447
        %452 = vst [vmem:[%s235] sm:$0xff] %v450
        %s453 = smul.u32 2, %s21
        %p454 = scmp.lt.s32.totalorder %s20, 1
        %s455 = scalar_select %p454, %s20, 1
        %p456 = scmp.lt.s32.totalorder %s453, 1
        %s457 = scalar_select %p456, %s453, 1
        %s458 = smul.addr %s455, 2
        %s459 = sadd.s32 %s457, %s458
        %s460 = smul.addr %s459, 4
        %s461 = scalar_lea.vmem %s3, %s460
        // Predicated region
        $region41: #{context_gating_forward.1} parent=31 // pred_check
          %p462 = pneg %p118
        $region42: #{context_gating_forward.1} parent=31 // pred_check_branch
          %464 = sbr.rel (%p462) target = $region44
        $region43: #{context_gating_forward.1} parent=31 // pred_region
          %s465 = smul.u32 2, %s21
        $region44: #{context_gating_forward.1} parent=31 // pred_fallthru
          _
      $region32: #{context_gating_forward.1} parent=5 // pred_fallthru
        _
      %p466 = scmp.le.s32.totalorder 2, %s11
      // Predicated region
      $region45: #{context_gating_forward.1} parent=5 // pred_check
        %p467 = pneg %p466
      $region46: #{context_gating_forward.1} parent=5 // pred_check_branch
        %469 = sbr.rel (%p467) target = $region48
      $region47: #{context_gating_forward.1} parent=5 // pred_region
        %s470 = ssub.s32 %s11, 2
        // Predicated region
        $region49: #{context_gating_forward.1} parent=47 // pred_check
          %p471 = pneg %p124
        $region50: #{context_gating_forward.1} parent=47 // pred_check_branch
          %473 = sbr.rel (%p471) target = $region52
        $region51: #{context_gating_forward.1} parent=47 // pred_region
          %s474 = smul.u32 2, %s23
          %p475 = scmp.lt.s32.totalorder %s22, 1
          %s476 = scalar_select %p475, %s22, 1
          %p477 = scmp.lt.s32.totalorder %s474, 1
          %s478 = scalar_select %p477, %s474, 1
          %s479 = smul.addr %s476, 2
          %s480 = sadd.s32 %s478, %s479
          %s481 = smul.addr %s480, 4
          %s482 = scalar_lea.vmem %s3, %s481
        $region52: #{context_gating_forward.1} parent=47 // pred_fallthru
          _
      $region48: #{context_gating_forward.1} parent=5 // pred_fallthru
        _
    $region6: #{context_gating_forward.1} parent=1 // loop_footer
      %s15 = sadd.s32 1, %s11
    $region7: #{context_gating_forward.1} parent=1 // loop_footer_branch
      %10 = sbr.rel target = $region3
    $region8: #{context_gating_forward.1} parent=1 // loop_exit
      _
    %483 = vsyncpa [#allocation3], 1
    %s484 = scalar_lea.sflag [#allocation3], 1
    %485 = vsyncpa %s484, 1
    %486 = vsyncpa [#allocation5], 1

</llo_original>
